<compile_context>
chip_gen: v6e
topology: v6e:2x2x1
jax: 0.10.0
libtpu: 0.0.40
codegen_flags: <defaults>
</compile_context>

<pallas_src>
import dataclasses

import jax
import jax.numpy as jnp
from jax.experimental import pallas as pl
from jax.experimental.pallas import tpu as pltpu


@dataclasses.dataclass
class Config:
    num_neurons: int = 8
    num_states: int = 4
    input_dim: int = 16


# ---------------------------------------------------------------------------
# Kernel (transposed: batch on the lane axis)
# ---------------------------------------------------------------------------
def _hybrid_kernel_t(xt_ref, nt_ref, wenn_ref, win_ref, bin_ref, wbic_ref,
                     bfold_ref, o_ref):
    """out^T = W_enn_fold^T @ x^T
             + W_bic_fold^T @ (tanh(W_in^T @ x^T + b_in^T) + 0.1 * noise^T)
             + b_fold^T

    All blocks are lane-dense ([*, tm] with tm % 128 == 0 on the tiled path);
    sublane splits are avoided entirely by using two small matmuls.
    Activations may be stored in bf16; compute is upcast to f32 (legal on v5e).
    """
    xt = xt_ref[...].astype(jnp.float32)          # [D, tm]
    nt = nt_ref[...].astype(jnp.float32)          # [n_paths, tm]

    enn = jnp.dot(wenn_ref[...], xt,
                  preferred_element_type=jnp.float32)                 # [NS, tm]
    proj = jnp.dot(win_ref[...], xt,
                   preferred_element_type=jnp.float32) + bin_ref[...]  # [n_paths, tm]
    mock = jnp.tanh(proj) + 0.1 * nt                                    # mock BICEP paths
    out = enn + jnp.dot(wbic_ref[...], mock,
                        preferred_element_type=jnp.float32) + bfold_ref[...]
    o_ref[...] = out.astype(o_ref.dtype)


# ---------------------------------------------------------------------------
# Parameter construction / offline folding (transposed layout)
# ---------------------------------------------------------------------------
def init_params(config, key):
    """Deterministic parameter init matching the module's layer shapes."""
    D = config.input_dim
    N, S = config.num_neurons, config.num_states
    NS = N * S
    n_paths = N * 2                    # BICEPNeuralLayer(n_paths=num_neurons*2)

    ks = jax.random.split(key, 5)

    def lin(k, fan_in, fan_out):
        bound = 1.0 / jnp.sqrt(fan_in)
        kw, kb = jax.random.split(k)
        w = jax.random.uniform(kw, (fan_in, fan_out), jnp.float32, -bound, bound)
        b = jax.random.uniform(kb, (1, fan_out), jnp.float32, -bound, bound)
        return w, b

    enn_w, enn_b = lin(ks[0], D, NS)            # ENN core stub
    bin_w, bin_b = lin(ks[1], D, n_paths)       # bicep.input_projection
    bout_w, bout_b = lin(ks[2], n_paths, NS)    # bicep.output_projection
    fus_w, fus_b = lin(ks[3], 2 * NS, NS)       # fusion_layer
    out_w, out_b = lin(ks[4], NS, NS)           # output_layer

    return {
        "enn_w": enn_w, "enn_b": enn_b,
        "bicep_in_w": bin_w, "bicep_in_b": bin_b,
        "bicep_out_w": bout_w, "bicep_out_b": bout_b,
        "fusion_w_enn": fus_w[:NS, :],          # first half of concat -> ENN features
        "fusion_w_bicep": fus_w[NS:, :],        # second half -> BICEP features
        "fusion_b": fus_b,
        "out_w": out_w, "out_b": out_b,
    }


def fold_params_t(params):
    """Fold the affine chain after tanh; store everything pre-transposed."""
    w_enn_fold = params["enn_w"] @ params["fusion_w_enn"] @ params["out_w"]          # [D, NS]
    w_bic_fold = params["bicep_out_w"] @ params["fusion_w_bicep"] @ params["out_w"]  # [n_paths, NS]
    b_fold = ((params["enn_b"] @ params["fusion_w_enn"]
               + params["bicep_out_b"] @ params["fusion_w_bicep"]
               + params["fusion_b"]) @ params["out_w"] + params["out_b"])            # [1, NS]
    return {
        "w_enn_t": jnp.asarray(w_enn_fold.T),            # [NS, D]
        "w_in_t": jnp.asarray(params["bicep_in_w"].T),   # [n_paths, D]
        "b_in_t": jnp.asarray(params["bicep_in_b"].T),   # [n_paths, 1]
        "w_bic_t": jnp.asarray(w_bic_fold.T),            # [NS, n_paths]
        "b_fold_t": jnp.asarray(b_fold.T),               # [NS, 1]
    }


# ---------------------------------------------------------------------------
# Wrapper
# ---------------------------------------------------------------------------
def enn_bicep_hybrid_forward(x, folded_t, noise, config, *,
                             max_batch_tile=4096,
                             activation_dtype=jnp.float32):
    """x: [B, input_dim] (or [B, T, input_dim]; last timestep used).
    noise: [B, n_paths] stand-in for torch.randn_like(projected).
    Returns [B, num_neurons, num_states]."""
    if x.ndim == 3:
        x = x[:, -1, :]                      # module uses last timestep
    B, D = x.shape
    N, S = config.num_neurons, config.num_states
    NS = N * S
    n_paths = noise.shape[-1]

    # Layout plumbing (would live upstream in a real pipeline): put batch on
    # the lane axis so every kernel block is lane-dense.
    x_t = x.T.astype(activation_dtype)           # [D, B]
    noise_t = noise.T.astype(activation_dtype)   # [n_paths, B]
    out_dtype = activation_dtype

    inputs = (x_t, noise_t,
              folded_t["w_enn_t"], folded_t["w_in_t"], folded_t["b_in_t"],
              folded_t["w_bic_t"], folded_t["b_fold_t"])

    act_bytes = jnp.dtype(activation_dtype).itemsize
    flops = 2 * B * (D * NS + D * n_paths + n_paths * NS)
    bytes_accessed = (act_bytes * B * (D + n_paths + NS)
                      + 4 * (NS * D + n_paths * D + n_paths + NS * n_paths + NS))
    cost = pl.CostEstimate(flops=flops, transcendentals=B * n_paths,
                           bytes_accessed=bytes_accessed)

    if B >= 256:
        # Tiled path: lane tile is a multiple of 128, capped, and chosen so the
        # grid has >= 2 steps (lets ("parallel",) shard batch across both
        # TensorCores on v7x).  pl.cdiv handles a partial final tile; no
        # divisibility requirement on B.
        tm = min(max_batch_tile, 128 * max(1, (B // 2) // 128))
        grid = (pl.cdiv(B, tm),)
        in_specs = [
            pl.BlockSpec((D, tm), lambda i: (0, i)),            # x^T
            pl.BlockSpec((n_paths, tm), lambda i: (0, i)),      # noise^T
            pl.BlockSpec((NS, D), lambda i: (0, 0)),            # W_enn_fold^T (resident)
            pl.BlockSpec((n_paths, D), lambda i: (0, 0)),       # W_in^T (resident)
            pl.BlockSpec((n_paths, 1), lambda i: (0, 0)),       # b_in^T
            pl.BlockSpec((NS, n_paths), lambda i: (0, 0)),      # W_bic_fold^T (resident)
            pl.BlockSpec((NS, 1), lambda i: (0, 0)),            # b_fold^T
        ]
        out_specs = pl.BlockSpec((NS, tm), lambda i: (0, i))
        out_t = pl.pallas_call(
            _hybrid_kernel_t,
            out_shape=jax.ShapeDtypeStruct((NS, B), out_dtype),
            grid=grid,
            in_specs=in_specs,
            out_specs=out_specs,
            compiler_params=pltpu.CompilerParams(
                dimension_semantics=("parallel",),
                vmem_limit_bytes=32 * 1024 * 1024),   # lane-dense tiles: ~3 MiB used
            cost_estimate=cost,
        )(*inputs)
    else:
        # Small-batch path: no grid, full arrays resident in VMEM, no pipeline
        # machinery.  Gated on batch size (footprint is tiny here), not on
        # divisibility.
        vmem = pl.BlockSpec(memory_space=pltpu.MemorySpace.VMEM)
        out_t = pl.pallas_call(
            _hybrid_kernel_t,
            out_shape=jax.ShapeDtypeStruct((NS, B), out_dtype),
            in_specs=[vmem] * len(inputs),
            out_specs=vmem,
            cost_estimate=cost,
        )(*inputs)

    # output.size(-1) == num_neurons*num_states -> view(B, N, S)
    return out_t.T.reshape(B, N, S)


# ---------------------------------------------------------------------------
# Pure-JAX reference (un-folded parameters) for correctness check
# ---------------------------------------------------------------------------
def reference_forward(x, params, noise, config):
    if x.ndim == 3:
        x = x[:, -1, :]
    enn_out = x @ params["enn_w"] + params["enn_b"]
    proj = x @ params["bicep_in_w"] + params["bicep_in_b"]
    mock = jnp.tanh(proj) + 0.1 * noise
    bicep = mock @ params["bicep_out_w"] + params["bicep_out_b"]
    fused = (enn_out @ params["fusion_w_enn"]
             + bicep @ params["fusion_w_bicep"] + params["fusion_b"])
    out = fused @ params["out_w"] + params["out_b"]
    return out.reshape(x.shape[0], config.num_neurons, config.num_states)


if __name__ == "__main__":
    config = Config(num_neurons=8, num_states=4, input_dim=16)
    n_paths = config.num_neurons * 2

    key = jax.random.PRNGKey(0)
    k_params, k_x, k_n, k_x2, k_n2, k_x3, k_n3 = jax.random.split(key, 7)

    params = init_params(config, k_params)
    folded_t = fold_params_t(params)

    # --- 1) small batch: no-grid, fully VMEM-resident path, f32 ---
    B = 2
    x = jax.random.normal(k_x, (B, config.input_dim), jnp.float32)
    noise = jax.random.normal(k_n, (B, n_paths), jnp.float32)
    out = jax.block_until_ready(enn_bicep_hybrid_forward(x, folded_t, noise, config))
    ref = reference_forward(x, params, noise, config)
    assert out.shape == (B, config.num_neurons, config.num_states), out.shape
    assert jnp.allclose(out, ref, atol=1e-4, rtol=1e-4), "small-batch mismatch vs reference"

    # --- 2) tiled lane-dense path, f32, 2-step parallel grid ---
    B2 = 4096
    x2 = jax.random.normal(k_x2, (B2, config.input_dim), jnp.float32)
    noise2 = jax.random.normal(k_n2, (B2, n_paths), jnp.float32)
    out2 = jax.block_until_ready(enn_bicep_hybrid_forward(x2, folded_t, noise2, config))
    ref2 = reference_forward(x2, params, noise2, config)
    assert out2.shape == (B2, config.num_neurons, config.num_states), out2.shape
    assert jnp.allclose(out2, ref2, atol=1e-4, rtol=1e-4), "tiled-batch mismatch vs reference"

    # --- 3) ragged batch (cdiv grid, partial final tile) + bf16 activation storage ---
    B3 = 1000
    x3 = jax.random.normal(k_x3, (B3, config.input_dim), jnp.float32)
    noise3 = jax.random.normal(k_n3, (B3, n_paths), jnp.float32)
    out3 = jax.block_until_ready(
        enn_bicep_hybrid_forward(x3, folded_t, noise3, config,
                                 activation_dtype=jnp.bfloat16))
    ref3 = reference_forward(x3, params, noise3, config)
    assert out3.shape == (B3, config.num_neurons, config.num_states), out3.shape
    assert jnp.allclose(out3.astype(jnp.float32), ref3, atol=5e-2, rtol=5e-2), \
        "bf16 ragged-batch mismatch vs reference"

    print("KERNEL_OK")
</pallas_src>

<mosaic_0001>
module attributes {stable_mosaic.version = 11 : i64} {
  func.func @_hybrid_kernel_t(%arg0: memref<16x2xf32, #tpu.memory_space<vmem>>, %arg1: memref<16x2xf32, #tpu.memory_space<vmem>>, %arg2: memref<32x16xf32, #tpu.memory_space<vmem>>, %arg3: memref<16x16xf32, #tpu.memory_space<vmem>>, %arg4: memref<16x1xf32, #tpu.memory_space<vmem>>, %arg5: memref<32x16xf32, #tpu.memory_space<vmem>>, %arg6: memref<32x1xf32, #tpu.memory_space<vmem>>, %arg7: memref<32x2xf32, #tpu.memory_space<vmem>>) attributes {dimension_semantics = [], scalar_prefetch = 0 : i64, scratch_operands = 0 : i64, tpu.core_type = #tpu.core_type<tc>} {
    %c0 = arith.constant 0 : index
    %c0_0 = arith.constant 0 : index
    %0 = vector.load %arg0[%c0, %c0_0] : memref<16x2xf32, #tpu.memory_space<vmem>>, vector<16x2xf32>
    %c0_1 = arith.constant 0 : index
    %c0_2 = arith.constant 0 : index
    %1 = vector.load %arg1[%c0_1, %c0_2] : memref<16x2xf32, #tpu.memory_space<vmem>>, vector<16x2xf32>
    %c0_3 = arith.constant 0 : index
    %c0_4 = arith.constant 0 : index
    %2 = vector.load %arg2[%c0_3, %c0_4] : memref<32x16xf32, #tpu.memory_space<vmem>>, vector<32x16xf32>
    %cst = arith.constant dense<0.000000e+00> : vector<32x2xf32>
    %3 = tpu.matmul %2, %0, %cst {dimension_numbers = #tpu.dot_dimension_numbers<[1], [0], [0], [1], [0, 0, 1, 1], [], []>} : vector<32x16xf32>, vector<16x2xf32>, vector<32x2xf32> -> vector<32x2xf32>
    %c0_5 = arith.constant 0 : index
    %c0_6 = arith.constant 0 : index
    %4 = vector.load %arg3[%c0_5, %c0_6] : memref<16x16xf32, #tpu.memory_space<vmem>>, vector<16x16xf32>
    %cst_7 = arith.constant dense<0.000000e+00> : vector<16x2xf32>
    %5 = tpu.matmul %4, %0, %cst_7 {dimension_numbers = #tpu.dot_dimension_numbers<[1], [0], [0], [1], [0, 0, 1, 1], [], []>} : vector<16x16xf32>, vector<16x2xf32>, vector<16x2xf32> -> vector<16x2xf32>
    %c0_8 = arith.constant 0 : index
    %c0_9 = arith.constant 0 : index
    %6 = vector.load %arg4[%c0_8, %c0_9] : memref<16x1xf32, #tpu.memory_space<vmem>>, vector<16x1xf32>
    %7 = vector.broadcast %6 : vector<16x1xf32> to vector<16x2xf32>
    %8 = arith.addf %5, %7 : vector<16x2xf32>
    %9 = math.tanh %8 : vector<16x2xf32>
    %cst_10 = arith.constant 1.000000e-01 : f32
    %10 = vector.broadcast %cst_10 : f32 to vector<16x2xf32>
    %11 = arith.mulf %10, %1 : vector<16x2xf32>
    %12 = arith.addf %9, %11 : vector<16x2xf32>
    %c0_11 = arith.constant 0 : index
    %c0_12 = arith.constant 0 : index
    %13 = vector.load %arg5[%c0_11, %c0_12] : memref<32x16xf32, #tpu.memory_space<vmem>>, vector<32x16xf32>
    %cst_13 = arith.constant dense<0.000000e+00> : vector<32x2xf32>
    %14 = tpu.matmul %13, %12, %cst_13 {dimension_numbers = #tpu.dot_dimension_numbers<[1], [0], [0], [1], [0, 0, 1, 1], [], []>} : vector<32x16xf32>, vector<16x2xf32>, vector<32x2xf32> -> vector<32x2xf32>
    %15 = arith.addf %3, %14 : vector<32x2xf32>
    %c0_14 = arith.constant 0 : index
    %c0_15 = arith.constant 0 : index
    %16 = vector.load %arg6[%c0_14, %c0_15] : memref<32x1xf32, #tpu.memory_space<vmem>>, vector<32x1xf32>
    %17 = vector.broadcast %16 : vector<32x1xf32> to vector<32x2xf32>
    %18 = arith.addf %15, %17 : vector<32x2xf32>
    %c0_16 = arith.constant 0 : index
    %c0_17 = arith.constant 0 : index
    %19 = vector.load %arg7[%c0_16, %c0_17] : memref<32x2xf32, #tpu.memory_space<vmem>>, vector<32x2xf32>
    tpu.vector_store %arg7[%c0_16, %c0_17], %18 {strides = array<i32>} : memref<32x2xf32, #tpu.memory_space<vmem>>, vector<32x2xf32>,
    return
  }
}

</mosaic_0001>

<llo_original>
// kernel: tpu_custom_call.1
$region0: #{tpu_custom_call.1}
  #allocation0 [shape = 'u32[]', space=smem, size = 0x4, offset = 0x4, fixed_abs, tag = 'smem constant byte address 0x4 - core index']
  #allocation1 [shape = 'u32[144,128]{1,0:T(1,128)}', space=vmem, size = 0x12000, scoped, tag = 'internal scratch']
  %s0 = inlined_call_operand.vmem [shape: f32[16,2], index: 0, kind: input, shape index: {}]
  %s1 = inlined_call_operand.vmem [shape: f32[16,2], index: 1, kind: input, shape index: {}]
  %s2 = inlined_call_operand.vmem [shape: f32[32,16], index: 2, kind: input, shape index: {}]
  %s3 = inlined_call_operand.vmem [shape: f32[16,16], index: 3, kind: input, shape index: {}]
  %s4 = inlined_call_operand.vmem [shape: f32[16,1], index: 4, kind: input, shape index: {}]
  %s5 = inlined_call_operand.vmem [shape: f32[32,16], index: 5, kind: input, shape index: {}]
  %s6 = inlined_call_operand.vmem [shape: f32[32,1], index: 6, kind: input, shape index: {}]
  %s7 = inlined_call_operand.vmem [shape: f32[32,2], index: 7, kind: output, shape index: {}]
  %s8 = sld [smem:[#allocation0]]
  $region38: #{tpu_custom_call.1} parent=0
    _
  %s10 = ssub.s32 1, %s8
  %s11 = scalar_select 0, %s10, %s8
  // Predicated region
  $region2: #{tpu_custom_call.1} parent=0 // pred_check
    _
  $region3: #{tpu_custom_call.1} parent=0 // pred_check_branch
    %13 = sbr.rel (0) target = $region5
  $region4: #{tpu_custom_call.1} parent=0 // pred_region
    _
  $region5: #{tpu_custom_call.1} parent=0 // pred_fallthru
    _
  // Predicated region
  $region6: #{tpu_custom_call.1} parent=0 // pred_check
    _
  $region7: #{tpu_custom_call.1} parent=0 // pred_check_branch
    %15 = sbr.rel (0) target = $region9
  $region8: #{tpu_custom_call.1} parent=0 // pred_region
    _
  $region9: #{tpu_custom_call.1} parent=0 // pred_fallthru
    _
  // Predicated region
  $region10: #{tpu_custom_call.1} parent=0 // pred_check
    _
  $region11: #{tpu_custom_call.1} parent=0 // pred_check_branch
    %17 = sbr.rel (0) target = $region13
  $region12: #{tpu_custom_call.1} parent=0 // pred_region
    _
  $region13: #{tpu_custom_call.1} parent=0 // pred_fallthru
    _
  // Predicated region
  $region14: #{tpu_custom_call.1} parent=0 // pred_check
    _
  $region15: #{tpu_custom_call.1} parent=0 // pred_check_branch
    %19 = sbr.rel (0) target = $region17
  $region16: #{tpu_custom_call.1} parent=0 // pred_region
    _
  $region17: #{tpu_custom_call.1} parent=0 // pred_fallthru
    _
  // Predicated region
  $region18: #{tpu_custom_call.1} parent=0 // pred_check
    _
  $region19: #{tpu_custom_call.1} parent=0 // pred_check_branch
    %21 = sbr.rel (0) target = $region21
  $region20: #{tpu_custom_call.1} parent=0 // pred_region
    _
  $region21: #{tpu_custom_call.1} parent=0 // pred_fallthru
    _
  // Predicated region
  $region22: #{tpu_custom_call.1} parent=0 // pred_check
    _
  $region23: #{tpu_custom_call.1} parent=0 // pred_check_branch
    %23 = sbr.rel (0) target = $region25
  $region24: #{tpu_custom_call.1} parent=0 // pred_region
    _
  $region25: #{tpu_custom_call.1} parent=0 // pred_fallthru
    _
  // Predicated region
  $region26: #{tpu_custom_call.1} parent=0 // pred_check
    _
  $region27: #{tpu_custom_call.1} parent=0 // pred_check_branch
    %25 = sbr.rel (0) target = $region29
  $region28: #{tpu_custom_call.1} parent=0 // pred_region
    _
  $region29: #{tpu_custom_call.1} parent=0 // pred_fallthru
    _
  %v26 = vld [vmem:[%s0] sm:$0xff]
  %v27 = vld [vmem:[%s0 + $0x8] sm:$0xff]
  %v28 = vld [vmem:[%s1] sm:$0xff]
  %v29 = vld [vmem:[%s1 + $0x8] sm:$0xff]
  %v30 = vld [vmem:[%s2] sm:$0xff]
  %v31 = vld [vmem:[%s2 + $0x8] sm:$0xff]
  %v32 = vld [vmem:[%s2 + $0x10] sm:$0xff]
  %v33 = vld [vmem:[%s2 + $0x18] sm:$0xff]
  %v34 = vld [vmem:[%s3] sm:$0xff]
  %v35 = vld [vmem:[%s3 + $0x8] sm:$0xff]
  %v36 = vld [vmem:[%s4] sm:$0xff]
  %v37 = vld [vmem:[%s4 + $0x8] sm:$0xff]
  %39 = vset.pattern.permute.xlu0 0
  %40 = vperm.xlu0 %39, %v36
  %v41 = vpop.permute.xlu0 %40
  %44 = vset.pattern.permute.xlu0 0
  %45 = vperm.xlu0 %44, %v37
  %v46 = vpop.permute.xlu0 %45
  %vm48 = vcmask 130048
  %v50 = vsel %vm48, %v34, 0
  %v53 = vsel %vm48, %v35, 0
  %55 = vmatprep.subr.mxu0 0.0
  %56 = vmatpush1.msra.mxu0 0.0
  %57 = vmatprep.subr.mxu0 0.0
  %58 = vmatpush1.msra.mxu0 0.0
  %59 = vmatprep.subr.mxu0 0.0
  %60 = vmatpush1.msra.mxu0 0.0
  %61 = vmatprep.subr.mxu0 0.0
  %62 = vmatpush1.msra.mxu0 0.0
  %63 = vmatprep.subr.mxu0 0.0
  %64 = vmatpush1.msra.mxu0 0.0
  %65 = vmatprep.subr.mxu0 0.0
  %66 = vmatpush1.msra.mxu0 0.0
  %67 = vmatprep.subr.mxu0 0.0
  %68 = vmatpush1.msra.mxu0 0.0
  %69 = vmatprep.subr.mxu0 0.0
  %70 = vmatpush1.msra.mxu0 0.0
  %71 = vmatprep.subr.mxu0 0.0
  %72 = vmatpush1.msra.mxu0 0.0
  %73 = vmatprep.subr.mxu0 0.0
  %74 = vmatpush1.msra.mxu0 0.0
  %75 = vmatprep.subr.mxu0 0.0
  %76 = vmatpush1.msra.mxu0 0.0
  %77 = vmatprep.subr.mxu0 0.0
  %78 = vmatpush1.msra.mxu0 0.0
  %79 = vmatprep.subr.mxu0 0.0
  %80 = vmatpush1.msra.mxu0 0.0
  %81 = vmatprep.subr.mxu0 0.0
  %82 = vmatpush1.msra.mxu0 0.0
  %83 = vmatprep.subr.mxu0 0.0
  %84 = vmatpush1.msra.mxu0 %v27
  %85 = vmatprep.subr.mxu0 0.0
  %86 = vmatpush1.msra.mxu0 %v26
  %87 = vmatprep.subr.mxu0 0.0
  %88 = vmatpush2.msra.mxu0 0.0
  %89 = vmatprep.subr.mxu0 0.0
  %90 = vmatpush2.msra.mxu0 0.0
  %91 = vmatprep.subr.mxu0 0.0
  %92 = vmatpush2.msra.mxu0 0.0
  %93 = vmatprep.subr.mxu0 0.0
  %94 = vmatpush2.msra.mxu0 0.0
  %95 = vmatprep.subr.mxu0 0.0
  %96 = vmatpush2.msra.mxu0 0.0
  %97 = vmatprep.subr.mxu0 0.0
  %98 = vmatpush2.msra.mxu0 0.0
  %99 = vmatprep.subr.mxu0 0.0
  %100 = vmatpush2.msra.mxu0 0.0
  %101 = vmatprep.subr.mxu0 0.0
  %102 = vmatpush2.msra.mxu0 0.0
  %103 = vmatprep.subr.mxu0 0.0
  %104 = vmatpush2.msra.mxu0 0.0
  %105 = vmatprep.subr.mxu0 0.0
  %106 = vmatpush2.msra.mxu0 0.0
  %107 = vmatprep.subr.mxu0 0.0
  %108 = vmatpush2.msra.mxu0 0.0
  %109 = vmatprep.subr.mxu0 0.0
  %110 = vmatpush2.msra.mxu0 0.0
  %111 = vmatprep.subr.mxu0 0.0
  %112 = vmatpush2.msra.mxu0 0.0
  %113 = vmatprep.subr.mxu0 0.0
  %114 = vmatpush2.msra.mxu0 0.0
  %115 = vmatprep.subr.mxu0 0.0
  %116 = vmatpush2.msra.mxu0 0.0
  %117 = vmatprep.subr.mxu0 0.0
  %118 = vmatpush2.msra.mxu0 0.0
  %119 = vmatprep.mubr.f32.mxu0 0.0
  %120 = vmatmul.mubr.f32.gmra.mxu0 %v50
  %v121 = vpop.f32.mrf.mxu0
  %v122 = vadd.f32 %v41, %v121
  %v123 = vpop.f32.mrf.mxu0
  %124 = vmatprep.mubr.f32.mxu0 0.0
  %125 = vmatmul.mubr.f32.gmra.mxu0 %v53
  %v126 = vpop.f32.mrf.mxu0
  %v127 = vadd.f32 %v46, %v126
  %v128 = vpop.f32.mrf.mxu0
  %129 = vdwg.mxu0
  %v130 = vtanh.pop %v122
  %v131 = vtanh.pop %v127
  %v132 = vmul.f32 %v28, 0.1
  %v133 = vmul.f32 %v29, 0.1
  %v134 = vadd.f32 %v130, %v132
  %v135 = vadd.f32 %v131, %v133
  %v136 = vld [vmem:[%s5] sm:$0xff]
  %v137 = vld [vmem:[%s5 + $0x8] sm:$0xff]
  %v138 = vld [vmem:[%s5 + $0x10] sm:$0xff]
  %v139 = vld [vmem:[%s5 + $0x18] sm:$0xff]
  %v141 = vsel %vm48, %v136, 0
  %v144 = vsel %vm48, %v137, 0
  %v147 = vsel %vm48, %v138, 0
  %v150 = vsel %vm48, %v139, 0
  %152 = vmatprep.subr.mxu0 0.0
  %153 = vmatpush1.msra.mxu0 0.0
  %154 = vmatprep.subr.mxu0 0.0
  %155 = vmatpush1.msra.mxu0 0.0
  %156 = vmatprep.subr.mxu0 0.0
  %157 = vmatpush1.msra.mxu0 0.0
  %158 = vmatprep.subr.mxu0 0.0
  %159 = vmatpush1.msra.mxu0 0.0
  %160 = vmatprep.subr.mxu0 0.0
  %161 = vmatpush1.msra.mxu0 0.0
  %162 = vmatprep.subr.mxu0 0.0
  %163 = vmatpush1.msra.mxu0 0.0
  %164 = vmatprep.subr.mxu0 0.0
  %165 = vmatpush1.msra.mxu0 0.0
  %166 = vmatprep.subr.mxu0 0.0
  %167 = vmatpush1.msra.mxu0 0.0
  %168 = vmatprep.subr.mxu0 0.0
  %169 = vmatpush1.msra.mxu0 0.0
  %170 = vmatprep.subr.mxu0 0.0
  %171 = vmatpush1.msra.mxu0 0.0
  %172 = vmatprep.subr.mxu0 0.0
  %173 = vmatpush1.msra.mxu0 0.0
  %174 = vmatprep.subr.mxu0 0.0
  %175 = vmatpush1.msra.mxu0 0.0
  %176 = vmatprep.subr.mxu0 0.0
  %177 = vmatpush1.msra.mxu0 0.0
  %178 = vmatprep.subr.mxu0 0.0
  %179 = vmatpush1.msra.mxu0 0.0
  %180 = vmatprep.subr.mxu0 0.0
  %181 = vmatpush1.msra.mxu0 %v135
  %182 = vmatprep.subr.mxu0 0.0
  %183 = vmatpush1.msra.mxu0 %v134
  %184 = vmatprep.subr.mxu0 0.0
  %185 = vmatpush2.msra.mxu0 0.0
  %186 = vmatprep.subr.mxu0 0.0
  %187 = vmatpush2.msra.mxu0 0.0
  %188 = vmatprep.subr.mxu0 0.0
  %189 = vmatpush2.msra.mxu0 0.0
  %190 = vmatprep.subr.mxu0 0.0
  %191 = vmatpush2.msra.mxu0 0.0
  %192 = vmatprep.subr.mxu0 0.0
  %193 = vmatpush2.msra.mxu0 0.0
  %194 = vmatprep.subr.mxu0 0.0
  %195 = vmatpush2.msra.mxu0 0.0
  %196 = vmatprep.subr.mxu0 0.0
  %197 = vmatpush2.msra.mxu0 0.0
  %198 = vmatprep.subr.mxu0 0.0
  %199 = vmatpush2.msra.mxu0 0.0
  %200 = vmatprep.subr.mxu0 0.0
  %201 = vmatpush2.msra.mxu0 0.0
  %202 = vmatprep.subr.mxu0 0.0
  %203 = vmatpush2.msra.mxu0 0.0
  %204 = vmatprep.subr.mxu0 0.0
  %205 = vmatpush2.msra.mxu0 0.0
  %206 = vmatprep.subr.mxu0 0.0
  %207 = vmatpush2.msra.mxu0 0.0
  %208 = vmatprep.subr.mxu0 0.0
  %209 = vmatpush2.msra.mxu0 0.0
  %210 = vmatprep.subr.mxu0 0.0
  %211 = vmatpush2.msra.mxu0 0.0
  %212 = vmatprep.subr.mxu0 0.0
  %213 = vmatpush2.msra.mxu0 0.0
  %214 = vmatprep.subr.mxu0 0.0
  %215 = vmatpush2.msra.mxu0 0.0
  %216 = vmatprep.mubr.f32.mxu0 0.0
  %217 = vmatmul.mubr.f32.gmra.mxu0 %v141
  %v218 = vpop.f32.mrf.mxu0
  %v219 = vadd.f32 0.0, %v218
  %v220 = vpop.f32.mrf.mxu0
  %221 = vmatprep.mubr.f32.mxu0 0.0
  %222 = vmatmul.mubr.f32.gmra.mxu0 %v144
  %v223 = vpop.f32.mrf.mxu0
  %v224 = vadd.f32 0.0, %v223
  %v225 = vpop.f32.mrf.mxu0
  %226 = vmatprep.mubr.f32.mxu0 0.0
  %227 = vmatmul.mubr.f32.gmra.mxu0 %v147
  %v228 = vpop.f32.mrf.mxu0
  %v229 = vadd.f32 0.0, %v228
  %v230 = vpop.f32.mrf.mxu0
  %231 = vmatprep.mubr.f32.mxu0 0.0
  %232 = vmatmul.mubr.f32.gmra.mxu0 %v150
  %v233 = vpop.f32.mrf.mxu0
  %v234 = vadd.f32 0.0, %v233
  %v235 = vpop.f32.mrf.mxu0
  %236 = vdwg.mxu0
  %v238 = vsel %vm48, %v30, 0
  %v241 = vsel %vm48, %v31, 0
  %v244 = vsel %vm48, %v32, 0
  %v247 = vsel %vm48, %v33, 0
  %249 = vmatprep.subr.mxu0 0.0
  %250 = vmatpush1.msra.mxu0 0.0
  %251 = vmatprep.subr.mxu0 0.0
  %252 = vmatpush1.msra.mxu0 0.0
  %253 = vmatprep.subr.mxu0 0.0
  %254 = vmatpush1.msra.mxu0 0.0
  %255 = vmatprep.subr.mxu0 0.0
  %256 = vmatpush1.msra.mxu0 0.0
  %257 = vmatprep.subr.mxu0 0.0
  %258 = vmatpush1.msra.mxu0 0.0
  %259 = vmatprep.subr.mxu0 0.0
  %260 = vmatpush1.msra.mxu0 0.0
  %261 = vmatprep.subr.mxu0 0.0
  %262 = vmatpush1.msra.mxu0 0.0
  %263 = vmatprep.subr.mxu0 0.0
  %264 = vmatpush1.msra.mxu0 0.0
  %265 = vmatprep.subr.mxu0 0.0
  %266 = vmatpush1.msra.mxu0 0.0
  %267 = vmatprep.subr.mxu0 0.0
  %268 = vmatpush1.msra.mxu0 0.0
  %269 = vmatprep.subr.mxu0 0.0
  %270 = vmatpush1.msra.mxu0 0.0
  %271 = vmatprep.subr.mxu0 0.0
  %272 = vmatpush1.msra.mxu0 0.0
  %273 = vmatprep.subr.mxu0 0.0
  %274 = vmatpush1.msra.mxu0 0.0
  %275 = vmatprep.subr.mxu0 0.0
  %276 = vmatpush1.msra.mxu0 0.0
  %277 = vmatprep.subr.mxu0 0.0
  %278 = vmatpush1.msra.mxu0 %v27
  %279 = vmatprep.subr.mxu0 0.0
  %280 = vmatpush1.msra.mxu0 %v26
  %281 = vmatprep.subr.mxu0 0.0
  %282 = vmatpush2.msra.mxu0 0.0
  %283 = vmatprep.subr.mxu0 0.0
  %284 = vmatpush2.msra.mxu0 0.0
  %285 = vmatprep.subr.mxu0 0.0
  %286 = vmatpush2.msra.mxu0 0.0
  %287 = vmatprep.subr.mxu0 0.0
  %288 = vmatpush2.msra.mxu0 0.0
  %289 = vmatprep.subr.mxu0 0.0
  %290 = vmatpush2.msra.mxu0 0.0
  %291 = vmatprep.subr.mxu0 0.0
  %292 = vmatpush2.msra.mxu0 0.0
  %293 = vmatprep.subr.mxu0 0.0
  %294 = vmatpush2.msra.mxu0 0.0
  %295 = vmatprep.subr.mxu0 0.0
  %296 = vmatpush2.msra.mxu0 0.0
  %297 = vmatprep.subr.mxu0 0.0
  %298 = vmatpush2.msra.mxu0 0.0
  %299 = vmatprep.subr.mxu0 0.0
  %300 = vmatpush2.msra.mxu0 0.0
  %301 = vmatprep.subr.mxu0 0.0
  %302 = vmatpush2.msra.mxu0 0.0
  %303 = vmatprep.subr.mxu0 0.0
  %304 = vmatpush2.msra.mxu0 0.0
  %305 = vmatprep.subr.mxu0 0.0
  %306 = vmatpush2.msra.mxu0 0.0
  %307 = vmatprep.subr.mxu0 0.0
  %308 = vmatpush2.msra.mxu0 0.0
  %309 = vmatprep.subr.mxu0 0.0
  %310 = vmatpush2.msra.mxu0 0.0
  %311 = vmatprep.subr.mxu0 0.0
  %312 = vmatpush2.msra.mxu0 0.0
  %313 = vmatprep.mubr.f32.mxu0 0.0
  %314 = vmatmul.mubr.f32.gmra.mxu0 %v238
  %v315 = vpop.f32.mrf.mxu0
  %v316 = vadd.f32 %v219, %v315
  %v317 = vpop.f32.mrf.mxu0
  %318 = vmatprep.mubr.f32.mxu0 0.0
  %319 = vmatmul.mubr.f32.gmra.mxu0 %v241
  %v320 = vpop.f32.mrf.mxu0
  %v321 = vadd.f32 %v224, %v320
  %v322 = vpop.f32.mrf.mxu0
  %323 = vmatprep.mubr.f32.mxu0 0.0
  %324 = vmatmul.mubr.f32.gmra.mxu0 %v244
  %v325 = vpop.f32.mrf.mxu0
  %v326 = vadd.f32 %v229, %v325
  %v327 = vpop.f32.mrf.mxu0
  %328 = vmatprep.mubr.f32.mxu0 0.0
  %329 = vmatmul.mubr.f32.gmra.mxu0 %v247
  %v330 = vpop.f32.mrf.mxu0
  %v331 = vadd.f32 %v234, %v330
  %v332 = vpop.f32.mrf.mxu0
  %333 = vdwg.mxu0
  %v334 = vld [vmem:[%s6] sm:$0xff]
  %v335 = vld [vmem:[%s6 + $0x8] sm:$0xff]
  %v336 = vld [vmem:[%s6 + $0x10] sm:$0xff]
  %v337 = vld [vmem:[%s6 + $0x18] sm:$0xff]
  %339 = vset.pattern.permute.xlu0 0
  %340 = vperm.xlu0 %339, %v334
  %v341 = vpop.permute.xlu0 %340
  %344 = vset.pattern.permute.xlu0 0
  %345 = vperm.xlu0 %344, %v335
  %v346 = vpop.permute.xlu0 %345
  %349 = vset.pattern.permute.xlu0 0
  %350 = vperm.xlu0 %349, %v336
  %v351 = vpop.permute.xlu0 %350
  %354 = vset.pattern.permute.xlu0 0
  %355 = vperm.xlu0 %354, %v337
  %v356 = vpop.permute.xlu0 %355
  %v358 = vadd.f32 %v316, %v341
  %v359 = vadd.f32 %v321, %v346
  %v360 = vadd.f32 %v326, %v351
  %v361 = vadd.f32 %v331, %v356
  %vm362 = vcmask 15360
  %363 = vst.msk [vmem:[%s7] sm:$0xff] %vm362, %v358
  %364 = vst.msk [vmem:[%s7 + $0x8] sm:$0xff] %vm362, %v359
  %365 = vst.msk [vmem:[%s7 + $0x10] sm:$0xff] %vm362, %v360
  %366 = vst.msk [vmem:[%s7 + $0x18] sm:$0xff] %vm362, %v361
  // Predicated region
  $region30: #{tpu_custom_call.1} parent=0 // pred_check
    _
  $region31: #{tpu_custom_call.1} parent=0 // pred_check_branch
    %368 = sbr.rel (0) target = $region33
  $region32: #{tpu_custom_call.1} parent=0 // pred_region
    _
  $region33: #{tpu_custom_call.1} parent=0 // pred_fallthru
    _
  // Predicated region
  $region34: #{tpu_custom_call.1} parent=0 // pred_check
    _
  $region35: #{tpu_custom_call.1} parent=0 // pred_check_branch
    %370 = sbr.rel (0) target = $region37
  $region36: #{tpu_custom_call.1} parent=0 // pred_region
    _
  $region37: #{tpu_custom_call.1} parent=0 // pred_fallthru
    _

</llo_original>
